<compile_context>
chip_gen: v6e
topology: v6e:2x2x1
jax: 0.10.0
libtpu: 0.0.40
codegen_flags: <defaults>
</compile_context>

<pallas_src>
import jax
import jax.numpy as jnp
from jax.experimental import pallas as pl
from jax.experimental.pallas import tpu as pltpu

_LANES = 128
GLOVE_DIM = 300


def _full_spec(shape):
    """Whole-array block at grid point 0 (single-invocation kernel)."""
    return pl.BlockSpec(shape, lambda i: (0,) * len(shape))


def _to_lane_major(v):
    """Flatten + zero-pad to a lane-dense (rows, 128) slab with rows % 8 == 0."""
    flat = jnp.ravel(v)
    n = flat.shape[0]
    rows = -(-n // _LANES)
    rows = -(-rows // 8) * 8
    pad = rows * _LANES - n
    return jnp.pad(flat, (0, pad)).reshape(rows, _LANES), n


def _from_lane_major(slab, n, shape):
    return slab.reshape(-1)[:n].reshape(shape)


# ----------------------------------------------------------------------------
# fused kernel: adapter forward + softmax + argmax + CE + z update + momentum
# ----------------------------------------------------------------------------
def fused_learner_kernel(hyp_ref, lbl_ref,                       # SMEM scalars
                         x_ref, w1_ref, b1_ref, w2_ref, b2_ref, w3_ref, b3_ref,
                         z_ref, jac_ref, fy_ref,                 # (Zr, 128)
                         h_ref, fx_ref, gxyz_ref,                # (Hr, 128)
                         logits_ref, probs_ref, slab_ref, z_out_ref, h_out_ref):
    nu = hyp_ref[0]
    beta = hyp_ref[1]

    # ---- adapter_model forward --------------------------------------------
    x = x_ref[...]
    h1 = jnp.tanh(jnp.dot(x, w1_ref[...], preferred_element_type=jnp.float32)
                  + b1_ref[...])
    h2 = jnp.tanh(jnp.dot(h1, w2_ref[...], preferred_element_type=jnp.float32)
                  + b2_ref[...])
    logits = (jnp.dot(h2, w3_ref[...], preferred_element_type=jnp.float32)
              + b3_ref[...])
    logits_ref[...] = logits

    B, C = logits.shape

    # F.softmax(q_outputs, dim=1) -- exact divide for bit-closeness to torch
    m = jnp.max(logits, axis=1, keepdims=True)
    e = jnp.exp(logits - m)
    s = jnp.sum(e, axis=1, keepdims=True)
    probs_ref[...] = e / s

    # torch.argmax(q_logits, dim=1) -- first maximal index
    col = jax.lax.broadcasted_iota(jnp.int32, (B, C), 1)
    pred = jnp.min(jnp.where(logits == m, col, C), axis=1, keepdims=True)  # (B,1) i32

    # nn.CrossEntropyLoss (mean reduction): labels read from the SMEM scalar
    # path, materialized as a (B,1) label column (B cheap where ops), then a
    # single (B,C) compare selects logits[b, label[b]].
    row_col = jax.lax.broadcasted_iota(jnp.int32, (B, 1), 0)
    lbl_col = jnp.zeros((B, 1), jnp.int32)
    for b in range(B):                                  # static unroll, B small
        lbl_col = jnp.where(row_col == b, lbl_ref[b], lbl_col)
    picked = jnp.sum(jnp.where(col == lbl_col, logits, 0.0), axis=1,
                     keepdims=True)                      # (B,1)
    log_z = m + jnp.log(s)
    loss = jnp.sum(log_z - picked, keepdims=True) * (1.0 / B)   # (1,1)

    # Pack pred + loss into one fully-dense (B, 128) slab: lane 0 = pred,
    # lane 1 = loss (replaces two sub-128-lane outputs with masked stores).
    lane = jax.lax.broadcasted_iota(jnp.int32, (B, _LANES), 1)
    slab = jnp.where(lane == 0, pred.astype(jnp.float32),
                     jnp.where(lane == 1, loss, 0.0))
    slab_ref[...] = slab

    # ---- hypergradient elementwise updates (lane-dense slabs) --------------
    # z_params -= nu * (jacob_flat_gy2z - Fy_gradient_flat)
    z_out_ref[...] = z_ref[...] - nu * (jac_ref[...] - fy_ref[...])
    # h = beta * h + (1 - beta) * (Fx - Gyxz)
    h_out_ref[...] = beta * h_ref[...] + (1.0 - beta) * (fx_ref[...] - gxyz_ref[...])


@jax.jit
def learner_step(x, params, labels, z, jac, fy, h, fx, gxyz, nu, beta):
    """Fused single pallas_call: adapter forward + CE/argmax + z/momentum updates.

    Returns (logits, probs, pred, loss, z_new, h_new).
    """
    w1, b1, w2, b2, w3, b3 = params
    B = x.shape[0]
    C = w3.shape[1]

    hyp = jnp.stack([jnp.asarray(nu, jnp.float32), jnp.asarray(beta, jnp.float32)])
    lbl = labels.astype(jnp.int32)

    z2d, zn = _to_lane_major(z)
    jac2d, _ = _to_lane_major(jac)
    fy2d, _ = _to_lane_major(fy)
    h2d, hn = _to_lane_major(h)
    fx2d, _ = _to_lane_major(fx)
    g2d, _ = _to_lane_major(gxyz)

    smem_spec = pl.BlockSpec(memory_space=pltpu.MemorySpace.SMEM)
    vmem_inputs = (x, w1, b1, w2, b2, w3, b3, z2d, jac2d, fy2d, h2d, fx2d, g2d)

    out_shape = (
        jax.ShapeDtypeStruct((B, C), jnp.float32),        # logits
        jax.ShapeDtypeStruct((B, C), jnp.float32),        # softmax probs
        jax.ShapeDtypeStruct((B, _LANES), jnp.float32),   # packed pred/loss slab
        jax.ShapeDtypeStruct(z2d.shape, jnp.float32),     # z_new (lane-dense)
        jax.ShapeDtypeStruct(h2d.shape, jnp.float32),     # h_new (lane-dense)
    )

    logits, probs, slab, z2d_new, h2d_new = pl.pallas_call(
        fused_learner_kernel,
        grid=(1,),
        in_specs=[smem_spec, smem_spec] + [_full_spec(a.shape) for a in vmem_inputs],
        out_specs=tuple(_full_spec(o.shape) for o in out_shape),
        out_shape=out_shape,
        compiler_params=pltpu.CompilerParams(
            dimension_semantics=("arbitrary",)),
    )(hyp, lbl, *vmem_inputs)

    pred = slab[:, 0].astype(jnp.int32)
    loss = slab[0, 1]
    z_new = _from_lane_major(z2d_new, zn, z.shape)
    h_new = _from_lane_major(h2d_new, hn, h.shape)
    return logits, probs, pred, loss, z_new, h_new


# ----------------------------------------------------------------------------
# deterministic parameter init + driver
# ----------------------------------------------------------------------------
def init_adapter_params(key, encoder_dim, fc_dim, n_classes):
    ks = jax.random.split(key, 6)

    def lin(kw, kb, fan_in, fan_out):
        bound = 1.0 / jnp.sqrt(fan_in)
        w = jax.random.uniform(kw, (fan_in, fan_out), jnp.float32, -bound, bound)
        b = jax.random.uniform(kb, (1, fan_out), jnp.float32, -bound, bound)
        return w, b

    w1, b1 = lin(ks[0], ks[1], encoder_dim, fc_dim)
    w2, b2 = lin(ks[2], ks[3], fc_dim, fc_dim)
    w3, b3 = lin(ks[4], ks[5], fc_dim, n_classes)
    return (w1, b1, w2, b2, w3, b3)


if __name__ == "__main__":
    key = jax.random.PRNGKey(0)
    B, ENC, FC, NC = 8, 32, 32, 8            # small shapes consistent with args

    k_x, k_lbl, k_p, k_z, k_j, k_f, k_m1, k_m2 = jax.random.split(key, 8)
    x = jax.random.normal(k_x, (B, ENC), jnp.float32)         # embedding_features
    labels = jax.random.randint(k_lbl, (B,), 0, NC, jnp.int32)
    params = init_adapter_params(k_p, ENC, FC, NC)

    # hypergradient buffers (z_params shape matches adapter param count)
    param_count = ENC * FC + FC + FC * FC + FC + FC * NC + NC   # 2376
    z = jax.random.uniform(k_z, (param_count, 1), jnp.float32, -0.05, 0.05)
    jac = jax.random.normal(k_j, (param_count, 1), jnp.float32)
    fy = jax.random.normal(k_f, (param_count, 1), jnp.float32)

    # synthetic meta_model parameter block (word-embed-like shape) for momentum
    h = jnp.zeros((32, GLOVE_DIM), jnp.float32)
    fx = jax.random.normal(k_m1, (32, GLOVE_DIM), jnp.float32)
    gxyz = jax.random.normal(k_m2, (32, GLOVE_DIM), jnp.float32)

    nu = jnp.float32(0.01)     # device scalars: no host sync, no recompile storm
    beta = jnp.float32(0.9)

    logits, probs, pred, loss, z_new, h_new = learner_step(
        x, params, labels, z, jac, fy, h, fx, gxyz, nu, beta)
    jax.block_until_ready((logits, probs, pred, loss, z_new, h_new))

    # pure-JAX reference checks
    w1, b1, w2, b2, w3, b3 = params
    ref_logits = jnp.tanh(jnp.tanh(x @ w1 + b1) @ w2 + b2) @ w3 + b3
    ref_probs = jax.nn.softmax(ref_logits, axis=1)
    ref_loss = jnp.mean(-jax.nn.log_softmax(ref_logits, axis=1)[
        jnp.arange(B), labels])
    assert jnp.allclose(logits, ref_logits, atol=1e-5)
    assert jnp.allclose(probs, ref_probs, atol=1e-5)
    assert jnp.allclose(loss, ref_loss, atol=1e-5)
    assert jnp.array_equal(pred, jnp.argmax(ref_logits, axis=1).astype(jnp.int32))

    assert jnp.allclose(z_new, z - nu * (jac - fy), atol=1e-6)
    assert jnp.allclose(h_new, beta * h + (1 - beta) * (fx - gxyz), atol=1e-6)

    print("KERNEL_OK")
</pallas_src>

<mosaic_0001>
module attributes {stable_mosaic.version = 11 : i64} {
  func.func @fused_learner_kernel(%arg0: i32, %arg1: memref<2xf32, #tpu.memory_space<smem>>, %arg2: memref<8xi32, #tpu.memory_space<smem>>, %arg3: memref<8x32xf32, #tpu.memory_space<vmem>>, %arg4: memref<32x32xf32, #tpu.memory_space<vmem>>, %arg5: memref<1x32xf32, #tpu.memory_space<vmem>>, %arg6: memref<32x32xf32, #tpu.memory_space<vmem>>, %arg7: memref<1x32xf32, #tpu.memory_space<vmem>>, %arg8: memref<32x8xf32, #tpu.memory_space<vmem>>, %arg9: memref<1x8xf32, #tpu.memory_space<vmem>>, %arg10: memref<24x128xf32, #tpu.memory_space<vmem>>, %arg11: memref<24x128xf32, #tpu.memory_space<vmem>>, %arg12: memref<24x128xf32, #tpu.memory_space<vmem>>, %arg13: memref<80x128xf32, #tpu.memory_space<vmem>>, %arg14: memref<80x128xf32, #tpu.memory_space<vmem>>, %arg15: memref<80x128xf32, #tpu.memory_space<vmem>>, %arg16: memref<8x8xf32, #tpu.memory_space<vmem>>, %arg17: memref<8x8xf32, #tpu.memory_space<vmem>>, %arg18: memref<8x128xf32, #tpu.memory_space<vmem>>, %arg19: memref<24x128xf32, #tpu.memory_space<vmem>>, %arg20: memref<80x128xf32, #tpu.memory_space<vmem>>) attributes {dimension_semantics = [#tpu.dimension_semantics<arbitrary>], iteration_bounds = array<i64: 1>, scalar_prefetch = 0 : i64, scratch_operands = 0 : i64, tpu.core_type = #tpu.core_type<tc>, window_params = [{transform_indices = @transform_0, window_bounds = array<i64: 2>}, {transform_indices = @transform_1, window_bounds = array<i64: 8>}, {pipeline_mode = #tpu.pipeline_mode<synchronous>, transform_indices = @transform_2, window_bounds = array<i64: 8, 32>}, {pipeline_mode = #tpu.pipeline_mode<synchronous>, transform_indices = @transform_3, window_bounds = array<i64: 32, 32>}, {pipeline_mode = #tpu.pipeline_mode<synchronous>, transform_indices = @transform_4, window_bounds = array<i64: 1, 32>}, {pipeline_mode = #tpu.pipeline_mode<synchronous>, transform_indices = @transform_5, window_bounds = array<i64: 32, 32>}, {pipeline_mode = #tpu.pipeline_mode<synchronous>, transform_indices = @transform_6, window_bounds = array<i64: 1, 32>}, {pipeline_mode = #tpu.pipeline_mode<synchronous>, transform_indices = @transform_7, window_bounds = array<i64: 32, 8>}, {pipeline_mode = #tpu.pipeline_mode<synchronous>, transform_indices = @transform_8, window_bounds = array<i64: 1, 8>}, {pipeline_mode = #tpu.pipeline_mode<synchronous>, transform_indices = @transform_9, window_bounds = array<i64: 24, 128>}, {pipeline_mode = #tpu.pipeline_mode<synchronous>, transform_indices = @transform_10, window_bounds = array<i64: 24, 128>}, {pipeline_mode = #tpu.pipeline_mode<synchronous>, transform_indices = @transform_11, window_bounds = array<i64: 24, 128>}, {pipeline_mode = #tpu.pipeline_mode<synchronous>, transform_indices = @transform_12, window_bounds = array<i64: 80, 128>}, {pipeline_mode = #tpu.pipeline_mode<synchronous>, transform_indices = @transform_13, window_bounds = array<i64: 80, 128>}, {pipeline_mode = #tpu.pipeline_mode<synchronous>, transform_indices = @transform_14, window_bounds = array<i64: 80, 128>}, {pipeline_mode = #tpu.pipeline_mode<synchronous>, transform_indices = @transform_15, window_bounds = array<i64: 8, 8>}, {pipeline_mode = #tpu.pipeline_mode<synchronous>, transform_indices = @transform_16, window_bounds = array<i64: 8, 8>}, {pipeline_mode = #tpu.pipeline_mode<synchronous>, transform_indices = @transform_17, window_bounds = array<i64: 8, 128>}, {pipeline_mode = #tpu.pipeline_mode<synchronous>, transform_indices = @transform_18, window_bounds = array<i64: 24, 128>}, {pipeline_mode = #tpu.pipeline_mode<synchronous>, transform_indices = @transform_19, window_bounds = array<i64: 80, 128>}]} {
    %c0 = arith.constant 0 : index
    %0 = memref.load %arg1[%c0] : memref<2xf32, #tpu.memory_space<smem>>
    %c1 = arith.constant 1 : index
    %1 = memref.load %arg1[%c1] : memref<2xf32, #tpu.memory_space<smem>>
    %c0_0 = arith.constant 0 : index
    %c0_1 = arith.constant 0 : index
    %2 = vector.load %arg3[%c0_0, %c0_1] : memref<8x32xf32, #tpu.memory_space<vmem>>, vector<8x32xf32>
    %c0_2 = arith.constant 0 : index
    %c0_3 = arith.constant 0 : index
    %3 = vector.load %arg4[%c0_2, %c0_3] : memref<32x32xf32, #tpu.memory_space<vmem>>, vector<32x32xf32>
    %cst = arith.constant dense<0.000000e+00> : vector<8x32xf32>
    %4 = tpu.matmul %2, %3, %cst {dimension_numbers = #tpu.dot_dimension_numbers<[1], [0], [0], [1], [0, 0, 1, 1], [], []>} : vector<8x32xf32>, vector<32x32xf32>, vector<8x32xf32> -> vector<8x32xf32>
    %c0_4 = arith.constant 0 : index
    %c0_5 = arith.constant 0 : index
    %5 = vector.load %arg5[%c0_4, %c0_5] : memref<1x32xf32, #tpu.memory_space<vmem>>, vector<1x32xf32>
    %6 = vector.broadcast %5 : vector<1x32xf32> to vector<8x32xf32>
    %7 = arith.addf %4, %6 : vector<8x32xf32>
    %8 = math.tanh %7 : vector<8x32xf32>
    %c0_6 = arith.constant 0 : index
    %c0_7 = arith.constant 0 : index
    %9 = vector.load %arg6[%c0_6, %c0_7] : memref<32x32xf32, #tpu.memory_space<vmem>>, vector<32x32xf32>
    %cst_8 = arith.constant dense<0.000000e+00> : vector<8x32xf32>
    %10 = tpu.matmul %8, %9, %cst_8 {dimension_numbers = #tpu.dot_dimension_numbers<[1], [0], [0], [1], [0, 0, 1, 1], [], []>} : vector<8x32xf32>, vector<32x32xf32>, vector<8x32xf32> -> vector<8x32xf32>
    %c0_9 = arith.constant 0 : index
    %c0_10 = arith.constant 0 : index
    %11 = vector.load %arg7[%c0_9, %c0_10] : memref<1x32xf32, #tpu.memory_space<vmem>>, vector<1x32xf32>
    %12 = vector.broadcast %11 : vector<1x32xf32> to vector<8x32xf32>
    %13 = arith.addf %10, %12 : vector<8x32xf32>
    %14 = math.tanh %13 : vector<8x32xf32>
    %c0_11 = arith.constant 0 : index
    %c0_12 = arith.constant 0 : index
    %15 = vector.load %arg8[%c0_11, %c0_12] : memref<32x8xf32, #tpu.memory_space<vmem>>, vector<32x8xf32>
    %cst_13 = arith.constant dense<0.000000e+00> : vector<8x8xf32>
    %16 = tpu.matmul %14, %15, %cst_13 {dimension_numbers = #tpu.dot_dimension_numbers<[1], [0], [0], [1], [0, 0, 1, 1], [], []>} : vector<8x32xf32>, vector<32x8xf32>, vector<8x8xf32> -> vector<8x8xf32>
    %c0_14 = arith.constant 0 : index
    %c0_15 = arith.constant 0 : index
    %17 = vector.load %arg9[%c0_14, %c0_15] : memref<1x8xf32, #tpu.memory_space<vmem>>, vector<1x8xf32>
    %18 = vector.broadcast %17 : vector<1x8xf32> to vector<8x8xf32>
    %19 = arith.addf %16, %18 : vector<8x8xf32>
    %c0_16 = arith.constant 0 : index
    %c0_17 = arith.constant 0 : index
    %20 = vector.load %arg16[%c0_16, %c0_17] : memref<8x8xf32, #tpu.memory_space<vmem>>, vector<8x8xf32>
    tpu.vector_store %arg16[%c0_16, %c0_17], %19 {strides = array<i32>} : memref<8x8xf32, #tpu.memory_space<vmem>>, vector<8x8xf32>,
    %cst_18 = arith.constant dense<0xFF800000> : vector<8xf32>
    %21 = vector.multi_reduction <maximumf>, %19, %cst_18 [1] : vector<8x8xf32> to vector<8xf32>
    %22 = vector.shape_cast %21 : vector<8xf32> to vector<8x1xf32>
    %23 = vector.broadcast %22 : vector<8x1xf32> to vector<8x8xf32>
    %24 = arith.subf %19, %23 : vector<8x8xf32>
    %25 = math.exp %24 : vector<8x8xf32>
    %cst_19 = arith.constant dense<0.000000e+00> : vector<8xf32>
    %26 = vector.multi_reduction <add>, %25, %cst_19 [1] : vector<8x8xf32> to vector<8xf32>
    %27 = vector.shape_cast %26 : vector<8xf32> to vector<8x1xf32>
    %28 = vector.broadcast %27 : vector<8x1xf32> to vector<8x8xf32>
    %29 = arith.divf %25, %28 : vector<8x8xf32>
    %c0_20 = arith.constant 0 : index
    %c0_21 = arith.constant 0 : index
    %30 = vector.load %arg17[%c0_20, %c0_21] : memref<8x8xf32, #tpu.memory_space<vmem>>, vector<8x8xf32>
    tpu.vector_store %arg17[%c0_20, %c0_21], %29 {strides = array<i32>} : memref<8x8xf32, #tpu.memory_space<vmem>>, vector<8x8xf32>,
    %31 = tpu.iota {dimensions = array<i32: 1>} : vector<8x8xi32>
    %32 = vector.broadcast %22 : vector<8x1xf32> to vector<8x8xf32>
    %33 = arith.cmpf oeq, %19, %32 : vector<8x8xf32>
    %c8_i32 = arith.constant 8 : i32
    %34 = vector.broadcast %c8_i32 : i32 to vector<8x8xi32>
    %35 = arith.select %33, %31, %34 : vector<8x8xi1>, vector<8x8xi32>
    %cst_22 = arith.constant dense<2147483647> : vector<8xi32>
    %36 = vector.multi_reduction <minsi>, %35, %cst_22 [1] : vector<8x8xi32> to vector<8xi32>
    %37 = vector.shape_cast %36 : vector<8xi32> to vector<8x1xi32>
    %38 = tpu.iota {dimensions = array<i32: 0>} : vector<8x1xi32>
    %c0_i32 = arith.constant 0 : i32
    %39 = vector.broadcast %c0_i32 : i32 to vector<8x1xi32>
    %c0_i32_23 = arith.constant 0 : i32
    %40 = vector.broadcast %c0_i32_23 : i32 to vector<8x1xi32>
    %41 = arith.cmpi eq, %38, %40 : vector<8x1xi32>
    %c0_24 = arith.constant 0 : index
    %42 = memref.load %arg2[%c0_24] : memref<8xi32, #tpu.memory_space<smem>>
    %43 = vector.broadcast %42 : i32 to vector<8x1xi32>
    %44 = arith.select %41, %43, %39 : vector<8x1xi1>, vector<8x1xi32>
    %c1_i32 = arith.constant 1 : i32
    %45 = vector.broadcast %c1_i32 : i32 to vector<8x1xi32>
    %46 = arith.cmpi eq, %38, %45 : vector<8x1xi32>
    %c1_25 = arith.constant 1 : index
    %47 = memref.load %arg2[%c1_25] : memref<8xi32, #tpu.memory_space<smem>>
    %48 = vector.broadcast %47 : i32 to vector<8x1xi32>
    %49 = arith.select %46, %48, %44 : vector<8x1xi1>, vector<8x1xi32>
    %c2_i32 = arith.constant 2 : i32
    %50 = vector.broadcast %c2_i32 : i32 to vector<8x1xi32>
    %51 = arith.cmpi eq, %38, %50 : vector<8x1xi32>
    %c2 = arith.constant 2 : index
    %52 = memref.load %arg2[%c2] : memref<8xi32, #tpu.memory_space<smem>>
    %53 = vector.broadcast %52 : i32 to vector<8x1xi32>
    %54 = arith.select %51, %53, %49 : vector<8x1xi1>, vector<8x1xi32>
    %c3_i32 = arith.constant 3 : i32
    %55 = vector.broadcast %c3_i32 : i32 to vector<8x1xi32>
    %56 = arith.cmpi eq, %38, %55 : vector<8x1xi32>
    %c3 = arith.constant 3 : index
    %57 = memref.load %arg2[%c3] : memref<8xi32, #tpu.memory_space<smem>>
    %58 = vector.broadcast %57 : i32 to vector<8x1xi32>
    %59 = arith.select %56, %58, %54 : vector<8x1xi1>, vector<8x1xi32>
    %c4_i32 = arith.constant 4 : i32
    %60 = vector.broadcast %c4_i32 : i32 to vector<8x1xi32>
    %61 = arith.cmpi eq, %38, %60 : vector<8x1xi32>
    %c4 = arith.constant 4 : index
    %62 = memref.load %arg2[%c4] : memref<8xi32, #tpu.memory_space<smem>>
    %63 = vector.broadcast %62 : i32 to vector<8x1xi32>
    %64 = arith.select %61, %63, %59 : vector<8x1xi1>, vector<8x1xi32>
    %c5_i32 = arith.constant 5 : i32
    %65 = vector.broadcast %c5_i32 : i32 to vector<8x1xi32>
    %66 = arith.cmpi eq, %38, %65 : vector<8x1xi32>
    %c5 = arith.constant 5 : index
    %67 = memref.load %arg2[%c5] : memref<8xi32, #tpu.memory_space<smem>>
    %68 = vector.broadcast %67 : i32 to vector<8x1xi32>
    %69 = arith.select %66, %68, %64 : vector<8x1xi1>, vector<8x1xi32>
    %c6_i32 = arith.constant 6 : i32
    %70 = vector.broadcast %c6_i32 : i32 to vector<8x1xi32>
    %71 = arith.cmpi eq, %38, %70 : vector<8x1xi32>
    %c6 = arith.constant 6 : index
    %72 = memref.load %arg2[%c6] : memref<8xi32, #tpu.memory_space<smem>>
    %73 = vector.broadcast %72 : i32 to vector<8x1xi32>
    %74 = arith.select %71, %73, %69 : vector<8x1xi1>, vector<8x1xi32>
    %c7_i32 = arith.constant 7 : i32
    %75 = vector.broadcast %c7_i32 : i32 to vector<8x1xi32>
    %76 = arith.cmpi eq, %38, %75 : vector<8x1xi32>
    %c7 = arith.constant 7 : index
    %77 = memref.load %arg2[%c7] : memref<8xi32, #tpu.memory_space<smem>>
    %78 = vector.broadcast %77 : i32 to vector<8x1xi32>
    %79 = arith.select %76, %78, %74 : vector<8x1xi1>, vector<8x1xi32>
    %80 = vector.broadcast %79 : vector<8x1xi32> to vector<8x8xi32>
    %81 = arith.cmpi eq, %31, %80 : vector<8x8xi32>
    %cst_26 = arith.constant 0.000000e+00 : f32
    %82 = vector.broadcast %cst_26 : f32 to vector<8x8xf32>
    %83 = arith.select %81, %19, %82 : vector<8x8xi1>, vector<8x8xf32>
    %cst_27 = arith.constant dense<0.000000e+00> : vector<8xf32>
    %84 = vector.multi_reduction <add>, %83, %cst_27 [1] : vector<8x8xf32> to vector<8xf32>
    %85 = vector.shape_cast %84 : vector<8xf32> to vector<8x1xf32>
    %86 = math.log %27 : vector<8x1xf32>
    %87 = arith.addf %22, %86 : vector<8x1xf32>
    %88 = arith.subf %87, %85 : vector<8x1xf32>
    %89 = vector.shape_cast %88 : vector<8x1xf32> to vector<1x8x1xf32>
    %cst_28 = arith.constant dense<0.000000e+00> : vector<1xf32>
    %90 = vector.multi_reduction <add>, %89, %cst_28 [1, 2] : vector<1x8x1xf32> to vector<1xf32>
    %91 = vector.shape_cast %90 : vector<1xf32> to vector<1x1x1xf32>
    %92 = vector.extract %91[0, 0, 0] : f32 from vector<1x1x1xf32>
    %93 = vector.broadcast %92 : f32 to vector<1x1xf32>
    %cst_29 = arith.constant 1.250000e-01 : f32
    %94 = vector.broadcast %cst_29 : f32 to vector<1x1xf32>
    %95 = arith.mulf %93, %94 : vector<1x1xf32>
    %96 = tpu.iota {dimensions = array<i32: 1>} : vector<8x128xi32>
    %c0_i32_30 = arith.constant 0 : i32
    %97 = vector.broadcast %c0_i32_30 : i32 to vector<8x128xi32>
    %98 = arith.cmpi eq, %96, %97 : vector<8x128xi32>
    %99 = arith.sitofp %37 : vector<8x1xi32> to vector<8x1xf32>
    %c1_i32_31 = arith.constant 1 : i32
    %100 = vector.broadcast %c1_i32_31 : i32 to vector<8x128xi32>
    %101 = arith.cmpi eq, %96, %100 : vector<8x128xi32>
    %cst_32 = arith.constant 0.000000e+00 : f32
    %102 = vector.shape_cast %95 : vector<1x1xf32> to vector<1x1xf32>
    %103 = vector.broadcast %102 : vector<1x1xf32> to vector<8x128xf32>
    %104 = vector.broadcast %cst_32 : f32 to vector<8x128xf32>
    %105 = arith.select %101, %103, %104 : vector<8x128xi1>, vector<8x128xf32>
    %106 = vector.shape_cast %99 : vector<8x1xf32> to vector<8x1xf32>
    %107 = vector.broadcast %106 : vector<8x1xf32> to vector<8x128xf32>
    %108 = arith.select %98, %107, %105 : vector<8x128xi1>, vector<8x128xf32>
    %c0_33 = arith.constant 0 : index
    %c0_34 = arith.constant 0 : index
    %109 = vector.load %arg18[%c0_33, %c0_34] : memref<8x128xf32, #tpu.memory_space<vmem>>, vector<8x128xf32>
    tpu.vector_store %arg18[%c0_33, %c0_34], %108 {strides = array<i32>} : memref<8x128xf32, #tpu.memory_space<vmem>>, vector<8x128xf32>,
    %c0_35 = arith.constant 0 : index
    %c0_36 = arith.constant 0 : index
    %110 = vector.load %arg10[%c0_35, %c0_36] : memref<24x128xf32, #tpu.memory_space<vmem>>, vector<24x128xf32>
    %c0_37 = arith.constant 0 : index
    %c0_38 = arith.constant 0 : index
    %111 = vector.load %arg11[%c0_37, %c0_38] : memref<24x128xf32, #tpu.memory_space<vmem>>, vector<24x128xf32>
    %c0_39 = arith.constant 0 : index
    %c0_40 = arith.constant 0 : index
    %112 = vector.load %arg12[%c0_39, %c0_40] : memref<24x128xf32, #tpu.memory_space<vmem>>, vector<24x128xf32>
    %113 = arith.subf %111, %112 : vector<24x128xf32>
    %114 = vector.broadcast %0 : f32 to vector<24x128xf32>
    %115 = arith.mulf %114, %113 : vector<24x128xf32>
    %116 = arith.subf %110, %115 : vector<24x128xf32>
    %c0_41 = arith.constant 0 : index
    %c0_42 = arith.constant 0 : index
    %117 = vector.load %arg19[%c0_41, %c0_42] : memref<24x128xf32, #tpu.memory_space<vmem>>, vector<24x128xf32>
    tpu.vector_store %arg19[%c0_41, %c0_42], %116 {strides = array<i32>} : memref<24x128xf32, #tpu.memory_space<vmem>>, vector<24x128xf32>,
    %c0_43 = arith.constant 0 : index
    %c0_44 = arith.constant 0 : index
    %118 = vector.load %arg13[%c0_43, %c0_44] : memref<80x128xf32, #tpu.memory_space<vmem>>, vector<80x128xf32>
    %119 = vector.broadcast %1 : f32 to vector<80x128xf32>
    %120 = arith.mulf %119, %118 : vector<80x128xf32>
    %cst_45 = arith.constant 1.000000e+00 : f32
    %121 = arith.subf %cst_45, %1 : f32
    %c0_46 = arith.constant 0 : index
    %c0_47 = arith.constant 0 : index
    %122 = vector.load %arg14[%c0_46, %c0_47] : memref<80x128xf32, #tpu.memory_space<vmem>>, vector<80x128xf32>
    %c0_48 = arith.constant 0 : index
    %c0_49 = arith.constant 0 : index
    %123 = vector.load %arg15[%c0_48, %c0_49] : memref<80x128xf32, #tpu.memory_space<vmem>>, vector<80x128xf32>
    %124 = arith.subf %122, %123 : vector<80x128xf32>
    %125 = vector.broadcast %121 : f32 to vector<80x128xf32>
    %126 = arith.mulf %125, %124 : vector<80x128xf32>
    %127 = arith.addf %120, %126 : vector<80x128xf32>
    %c0_50 = arith.constant 0 : index
    %c0_51 = arith.constant 0 : index
    %128 = vector.load %arg20[%c0_50, %c0_51] : memref<80x128xf32, #tpu.memory_space<vmem>>, vector<80x128xf32>
    tpu.vector_store %arg20[%c0_50, %c0_51], %127 {strides = array<i32>} : memref<80x128xf32, #tpu.memory_space<vmem>>, vector<80x128xf32>,
    return
  }
  func.func @transform_0(%arg0: i32) -> i32 {
    %c0_i32 = arith.constant 0 : i32
    %c0_i32_0 = arith.constant 0 : i32
    return %c0_i32 : i32
  }
  func.func @transform_1(%arg0: i32) -> i32 {
    %c0_i32 = arith.constant 0 : i32
    %c0_i32_0 = arith.constant 0 : i32
    return %c0_i32 : i32
  }
  func.func @transform_2(%arg0: i32) -> (i32, i32) {
    %c0_i32 = arith.constant 0 : i32
    %c0_i32_0 = arith.constant 0 : i32
    %c0_i32_1 = arith.constant 0 : i32
    return %c0_i32, %c0_i32_0 : i32, i32
  }
  func.func @transform_3(%arg0: i32) -> (i32, i32) {
    %c0_i32 = arith.constant 0 : i32
    %c0_i32_0 = arith.constant 0 : i32
    %c0_i32_1 = arith.constant 0 : i32
    return %c0_i32, %c0_i32_0 : i32, i32
  }
  func.func @transform_4(%arg0: i32) -> (i32, i32) {
    %c0_i32 = arith.constant 0 : i32
    %c0_i32_0 = arith.constant 0 : i32
    %c0_i32_1 = arith.constant 0 : i32
    return %c0_i32, %c0_i32_0 : i32, i32
  }
  func.func @transform_5(%arg0: i32) -> (i32, i32) {
    %c0_i32 = arith.constant 0 : i32
    %c0_i32_0 = arith.constant 0 : i32
    %c0_i32_1 = arith.constant 0 : i32
    return %c0_i32, %c0_i32_0 : i32, i32
  }
  func.func @transform_6(%arg0: i32) -> (i32, i32) {
    %c0_i32 = arith.constant 0 : i32
    %c0_i32_0 = arith.constant 0 : i32
    %c0_i32_1 = arith.constant 0 : i32
    return %c0_i32, %c0_i32_0 : i32, i32
  }
  func.func @transform_7(%arg0: i32) -> (i32, i32) {
    %c0_i32 = arith.constant 0 : i32
    %c0_i32_0 = arith.constant 0 : i32
    %c0_i32_1 = arith.constant 0 : i32
    return %c0_i32, %c0_i32_0 : i32, i32
  }
  func.func @transform_8(%arg0: i32) -> (i32, i32) {
    %c0_i32 = arith.constant 0 : i32
    %c0_i32_0 = arith.constant 0 : i32
    %c0_i32_1 = arith.constant 0 : i32
    return %c0_i32, %c0_i32_0 : i32, i32
  }
  func.func @transform_9(%arg0: i32) -> (i32, i32) {
    %c0_i32 = arith.constant 0 : i32
    %c0_i32_0 = arith.constant 0 : i32
    %c0_i32_1 = arith.constant 0 : i32
    return %c0_i32, %c0_i32_0 : i32, i32
  }
  func.func @transform_10(%arg0: i32) -> (i32, i32) {
    %c0_i32 = arith.constant 0 : i32
    %c0_i32_0 = arith.constant 0 : i32
    %c0_i32_1 = arith.constant 0 : i32
    return %c0_i32, %c0_i32_0 : i32, i32
  }
  func.func @transform_11(%arg0: i32) -> (i32, i32) {
    %c0_i32 = arith.constant 0 : i32
    %c0_i32_0 = arith.constant 0 : i32
    %c0_i32_1 = arith.constant 0 : i32
    return %c0_i32, %c0_i32_0 : i32, i32
  }
  func.func @transform_12(%arg0: i32) -> (i32, i32) {
    %c0_i32 = arith.constant 0 : i32
    %c0_i32_0 = arith.constant 0 : i32
    %c0_i32_1 = arith.constant 0 : i32
    return %c0_i32, %c0_i32_0 : i32, i32
  }
  func.func @transform_13(%arg0: i32) -> (i32, i32) {
    %c0_i32 = arith.constant 0 : i32
    %c0_i32_0 = arith.constant 0 : i32
    %c0_i32_1 = arith.constant 0 : i32
    return %c0_i32, %c0_i32_0 : i32, i32
  }
  func.func @transform_14(%arg0: i32) -> (i32, i32) {
    %c0_i32 = arith.constant 0 : i32
    %c0_i32_0 = arith.constant 0 : i32
    %c0_i32_1 = arith.constant 0 : i32
    return %c0_i32, %c0_i32_0 : i32, i32
  }
  func.func @transform_15(%arg0: i32) -> (i32, i32) {
    %c0_i32 = arith.constant 0 : i32
    %c0_i32_0 = arith.constant 0 : i32
    %c0_i32_1 = arith.constant 0 : i32
    return %c0_i32, %c0_i32_0 : i32, i32
  }
  func.func @transform_16(%arg0: i32) -> (i32, i32) {
    %c0_i32 = arith.constant 0 : i32
    %c0_i32_0 = arith.constant 0 : i32
    %c0_i32_1 = arith.constant 0 : i32
    return %c0_i32, %c0_i32_0 : i32, i32
  }
  func.func @transform_17(%arg0: i32) -> (i32, i32) {
    %c0_i32 = arith.constant 0 : i32
    %c0_i32_0 = arith.constant 0 : i32
    %c0_i32_1 = arith.constant 0 : i32
    return %c0_i32, %c0_i32_0 : i32, i32
  }
  func.func @transform_18(%arg0: i32) -> (i32, i32) {
    %c0_i32 = arith.constant 0 : i32
    %c0_i32_0 = arith.constant 0 : i32
    %c0_i32_1 = arith.constant 0 : i32
    return %c0_i32, %c0_i32_0 : i32, i32
  }
  func.func @transform_19(%arg0: i32) -> (i32, i32) {
    %c0_i32 = arith.constant 0 : i32
    %c0_i32_0 = arith.constant 0 : i32
    %c0_i32_1 = arith.constant 0 : i32
    return %c0_i32, %c0_i32_0 : i32, i32
  }
}

</mosaic_0001>

<llo_original>
// kernel: learner_step.1
$region0: #{learner_step.1}
  #allocation0 [shape = 'u32[]', space=smem, size = 0x4, offset = 0x4, fixed_abs, tag = 'smem constant byte address 0x4 - core index']
  #allocation1 [shape = 'u32[144,128]{1,0:T(1,128)}', space=vmem, size = 0x12000, scoped, tag = 'internal scratch']
  %s0 = inlined_call_operand.vmem [shape: f32[2], index: 0, kind: input, shape index: {}]
  %s1 = inlined_call_operand.vmem [shape: s32[8], index: 1, kind: input, shape index: {}]
  %s2 = inlined_call_operand.vmem [shape: f32[8,32], index: 2, kind: input, shape index: {}]
  %s3 = inlined_call_operand.vmem [shape: f32[32,32], index: 3, kind: input, shape index: {}]
  %s4 = inlined_call_operand.vmem [shape: f32[1,32], index: 4, kind: input, shape index: {}]
  %s5 = inlined_call_operand.vmem [shape: f32[32,32], index: 5, kind: input, shape index: {}]
  %s6 = inlined_call_operand.vmem [shape: f32[1,32], index: 6, kind: input, shape index: {}]
  %s7 = inlined_call_operand.vmem [shape: f32[32,8], index: 7, kind: input, shape index: {}]
  %s8 = inlined_call_operand.vmem [shape: f32[1,8], index: 8, kind: input, shape index: {}]
  %s9 = inlined_call_operand.vmem [shape: f32[24,128], index: 9, kind: input, shape index: {}]
  %s10 = inlined_call_operand.vmem [shape: f32[24,128], index: 10, kind: input, shape index: {}]
  %s11 = inlined_call_operand.vmem [shape: f32[24,128], index: 11, kind: input, shape index: {}]
  %s12 = inlined_call_operand.vmem [shape: f32[80,128], index: 12, kind: input, shape index: {}]
  %s13 = inlined_call_operand.vmem [shape: f32[80,128], index: 13, kind: input, shape index: {}]
  %s14 = inlined_call_operand.vmem [shape: f32[80,128], index: 14, kind: input, shape index: {}]
  %s15 = inlined_call_operand.hbm [shape: f32[8,8], index: 15, kind: output, shape index: {0}]
  %s16 = inlined_call_operand.hbm [shape: f32[8,8], index: 16, kind: output, shape index: {1}]
  %s17 = inlined_call_operand.vmem [shape: f32[8,128], index: 17, kind: output, shape index: {2}]
  %s18 = inlined_call_operand.vmem [shape: f32[24,128], index: 18, kind: output, shape index: {3}]
  %s19 = inlined_call_operand.vmem [shape: f32[80,128], index: 19, kind: output, shape index: {4}]
  %20 = xla_tuple %s15, %s16, %s17, %s18, %s19
  %s21 = sld [smem:[#allocation0]]
  $region110: #{learner_step.1} parent=0
    _
  %s23 = ssub.s32 1, %s21
  %s24 = scalar_select 0, %s23, %s21
  $region1: #{learner_step.1} parent=0
    #allocation2 [shape = 'u8[512]{0}', space=smem, size = 0x200, scoped, tag = 'input window, operand 0, single buffered']
    #allocation3 [shape = 's32[1]{0}', space=sflag, size = 0x4, scoped, tag = 'scoped memory for learner_step.1']
    #allocation4 [shape = 's32[1]{0}', space=sflag, size = 0x4, scoped, tag = 'scoped memory for learner_step.1']
    #allocation5 [shape = 'u8[512]{0}', space=smem, size = 0x200, scoped, tag = 'input window, operand 1, single buffered']
    #allocation6 [shape = 's32[1]{0}', space=sflag, size = 0x4, scoped, tag = 'scoped memory for learner_step.1']
    #allocation7 [shape = 'u8[4096]{0}', space=vmem, size = 0x1000, scoped, tag = 'output window, operand 0, single buffered']
    #allocation8 [shape = 'u8[4096]{0}', space=vmem, size = 0x1000, scoped, tag = 'output window, operand 1, single buffered']
    #allocation9 [shape = 's32[1]{0}', space=sflag, size = 0x4, scoped, tag = 'scoped memory for learner_step.1']
    %25 = vsyncpa [#allocation4], 0
    %26 = vsyncpa [#allocation6], 0
    %27 = vsyncpa [#allocation3], 0
    %28 = vsyncpa [#allocation9], 0
    // Predicated region
    $region2: #{learner_step.1} parent=1 // pred_check
      _
    $region3: #{learner_step.1} parent=1 // pred_check_branch
      %30 = sbr.rel (0) target = $region5
    $region4: #{learner_step.1} parent=1 // pred_region
      %s32 = ssub.s32 16, 16
      %33 = vsyncadd [#allocation4], %s32
      %s35 = sshll.u32 %s0, 4
      %s36 = int_to_ptr.vmem [resolvable:$true] %s35
      %38 = dma.vmem_to_smem %s36, 16, [#allocation2], [#allocation4]
    $region5: #{learner_step.1} parent=1 // pred_fallthru
      _
    // Predicated region
    $region6: #{learner_step.1} parent=1 // pred_check
      _
    $region7: #{learner_step.1} parent=1 // pred_check_branch
      %40 = sbr.rel (0) target = $region9
    $region8: #{learner_step.1} parent=1 // pred_region
      %s42 = ssub.s32 16, 16
      %43 = vsyncadd [#allocation6], %s42
      %s45 = sshll.u32 %s1, 4
      %s46 = int_to_ptr.vmem [resolvable:$true] %s45
      %48 = dma.vmem_to_smem %s46, 16, [#allocation5], [#allocation6]
    $region9: #{learner_step.1} parent=1 // pred_fallthru
      _
    // Predicated region
    $region10: #{learner_step.1} parent=1 // pred_check
      _
    $region11: #{learner_step.1} parent=1 // pred_check_branch
      %50 = sbr.rel (0) target = $region13
    $region12: #{learner_step.1} parent=1 // pred_region
      _
    $region13: #{learner_step.1} parent=1 // pred_fallthru
      _
    // Predicated region
    $region14: #{learner_step.1} parent=1 // pred_check
      _
    $region15: #{learner_step.1} parent=1 // pred_check_branch
      %52 = sbr.rel (0) target = $region17
    $region16: #{learner_step.1} parent=1 // pred_region
      _
    $region17: #{learner_step.1} parent=1 // pred_fallthru
      _
    // Predicated region
    $region18: #{learner_step.1} parent=1 // pred_check
      _
    $region19: #{learner_step.1} parent=1 // pred_check_branch
      %54 = sbr.rel (0) target = $region21
    $region20: #{learner_step.1} parent=1 // pred_region
      _
    $region21: #{learner_step.1} parent=1 // pred_fallthru
      _
    // Predicated region
    $region22: #{learner_step.1} parent=1 // pred_check
      _
    $region23: #{learner_step.1} parent=1 // pred_check_branch
      %56 = sbr.rel (0) target = $region25
    $region24: #{learner_step.1} parent=1 // pred_region
      _
    $region25: #{learner_step.1} parent=1 // pred_fallthru
      _
    // Predicated region
    $region26: #{learner_step.1} parent=1 // pred_check
      _
    $region27: #{learner_step.1} parent=1 // pred_check_branch
      %58 = sbr.rel (0) target = $region29
    $region28: #{learner_step.1} parent=1 // pred_region
      _
    $region29: #{learner_step.1} parent=1 // pred_fallthru
      _
    // Predicated region
    $region30: #{learner_step.1} parent=1 // pred_check
      _
    $region31: #{learner_step.1} parent=1 // pred_check_branch
      %60 = sbr.rel (0) target = $region33
    $region32: #{learner_step.1} parent=1 // pred_region
      _
    $region33: #{learner_step.1} parent=1 // pred_fallthru
      _
    // Predicated region
    $region34: #{learner_step.1} parent=1 // pred_check
      _
    $region35: #{learner_step.1} parent=1 // pred_check_branch
      %62 = sbr.rel (0) target = $region37
    $region36: #{learner_step.1} parent=1 // pred_region
      _
    $region37: #{learner_step.1} parent=1 // pred_fallthru
      _
    // Predicated region
    $region38: #{learner_step.1} parent=1 // pred_check
      _
    $region39: #{learner_step.1} parent=1 // pred_check_branch
      %64 = sbr.rel (0) target = $region41
    $region40: #{learner_step.1} parent=1 // pred_region
      _
    $region41: #{learner_step.1} parent=1 // pred_fallthru
      _
    // Predicated region
    $region42: #{learner_step.1} parent=1 // pred_check
      _
    $region43: #{learner_step.1} parent=1 // pred_check_branch
      %66 = sbr.rel (0) target = $region45
    $region44: #{learner_step.1} parent=1 // pred_region
      _
    $region45: #{learner_step.1} parent=1 // pred_fallthru
      _
    // Predicated region
    $region46: #{learner_step.1} parent=1 // pred_check
      _
    $region47: #{learner_step.1} parent=1 // pred_check_branch
      %68 = sbr.rel (0) target = $region49
    $region48: #{learner_step.1} parent=1 // pred_region
      _
    $region49: #{learner_step.1} parent=1 // pred_fallthru
      _
    // Predicated region
    $region50: #{learner_step.1} parent=1 // pred_check
      _
    $region51: #{learner_step.1} parent=1 // pred_check_branch
      %70 = sbr.rel (0) target = $region53
    $region52: #{learner_step.1} parent=1 // pred_region
      _
    $region53: #{learner_step.1} parent=1 // pred_fallthru
      _
    // Predicated region
    $region54: #{learner_step.1} parent=1 // pred_check
      _
    $region55: #{learner_step.1} parent=1 // pred_check_branch
      %72 = sbr.rel (0) target = $region57
    $region56: #{learner_step.1} parent=1 // pred_region
      _
    $region57: #{learner_step.1} parent=1 // pred_fallthru
      _
    // Predicated region
    $region58: #{learner_step.1} parent=1 // pred_check
      _
    $region59: #{learner_step.1} parent=1 // pred_check_branch
      %74 = sbr.rel (0) target = $region61
    $region60: #{learner_step.1} parent=1 // pred_region
      _
    $region61: #{learner_step.1} parent=1 // pred_fallthru
      _
    // Predicated region
    $region62: #{learner_step.1} parent=1 // pred_check
      _
    $region63: #{learner_step.1} parent=1 // pred_check_branch
      %76 = sbr.rel (0) target = $region65
    $region64: #{learner_step.1} parent=1 // pred_region
      %77 = dma.done [#allocation4], 16
    $region65: #{learner_step.1} parent=1 // pred_fallthru
      _
    // Predicated region
    $region66: #{learner_step.1} parent=1 // pred_check
      _
    $region67: #{learner_step.1} parent=1 // pred_check_branch
      %79 = sbr.rel (0) target = $region69
    $region68: #{learner_step.1} parent=1 // pred_region
      %80 = dma.done [#allocation6], 16
    $region69: #{learner_step.1} parent=1 // pred_fallthru
      _
    %81 = sfence
    %s82 = sld [smem:[#allocation2]]
    %s83 = sld [smem:[#allocation2 + $0x1]]
    %v84 = vld [vmem:[%s2] sm:$0xff]
    %v85 = vld [vmem:[%s3] sm:$0xff]
    %v86 = vld [vmem:[%s3 + $0x8] sm:$0xff]
    %v87 = vld [vmem:[%s3 + $0x10] sm:$0xff]
    %v88 = vld [vmem:[%s3 + $0x18] sm:$0xff]
    %v89 = vld [vmem:[%s4] sm:$0x1]
    %v91 = vlaneseq
    %v92 = vshrl.u32 %v91, 7
    %v93 = vsub.s32 0, %v92
    %v94 = vrot.slane %v89, %v93
    %vm96 = vcmask 261120
    %v98 = vsel %vm96, %v84, 0
    %100 = vmatprep.subr.mxu0 0.0
    %101 = vmatpush1.msra.mxu0 0.0
    %102 = vmatprep.subr.mxu0 0.0
    %103 = vmatpush1.msra.mxu0 0.0
    %104 = vmatprep.subr.mxu0 0.0
    %105 = vmatpush1.msra.mxu0 0.0
    %106 = vmatprep.subr.mxu0 0.0
    %107 = vmatpush1.msra.mxu0 0.0
    %108 = vmatprep.subr.mxu0 0.0
    %109 = vmatpush1.msra.mxu0 0.0
    %110 = vmatprep.subr.mxu0 0.0
    %111 = vmatpush1.msra.mxu0 0.0
    %112 = vmatprep.subr.mxu0 0.0
    %113 = vmatpush1.msra.mxu0 0.0
    %114 = vmatprep.subr.mxu0 0.0
    %115 = vmatpush1.msra.mxu0 0.0
    %116 = vmatprep.subr.mxu0 0.0
    %117 = vmatpush1.msra.mxu0 0.0
    %118 = vmatprep.subr.mxu0 0.0
    %119 = vmatpush1.msra.mxu0 0.0
    %120 = vmatprep.subr.mxu0 0.0
    %121 = vmatpush1.msra.mxu0 0.0
    %122 = vmatprep.subr.mxu0 0.0
    %123 = vmatpush1.msra.mxu0 0.0
    %124 = vmatprep.subr.mxu0 0.0
    %125 = vmatpush1.msra.mxu0 %v88
    %126 = vmatprep.subr.mxu0 0.0
    %127 = vmatpush1.msra.mxu0 %v87
    %128 = vmatprep.subr.mxu0 0.0
    %129 = vmatpush1.msra.mxu0 %v86
    %130 = vmatprep.subr.mxu0 0.0
    %131 = vmatpush1.msra.mxu0 %v85
    %132 = vmatprep.subr.mxu0 0.0
    %133 = vmatpush2.msra.mxu0 0.0
    %134 = vmatprep.subr.mxu0 0.0
    %135 = vmatpush2.msra.mxu0 0.0
    %136 = vmatprep.subr.mxu0 0.0
    %137 = vmatpush2.msra.mxu0 0.0
    %138 = vmatprep.subr.mxu0 0.0
    %139 = vmatpush2.msra.mxu0 0.0
    %140 = vmatprep.subr.mxu0 0.0
    %141 = vmatpush2.msra.mxu0 0.0
    %142 = vmatprep.subr.mxu0 0.0
    %143 = vmatpush2.msra.mxu0 0.0
    %144 = vmatprep.subr.mxu0 0.0
    %145 = vmatpush2.msra.mxu0 0.0
    %146 = vmatprep.subr.mxu0 0.0
    %147 = vmatpush2.msra.mxu0 0.0
    %148 = vmatprep.subr.mxu0 0.0
    %149 = vmatpush2.msra.mxu0 0.0
    %150 = vmatprep.subr.mxu0 0.0
    %151 = vmatpush2.msra.mxu0 0.0
    %152 = vmatprep.subr.mxu0 0.0
    %153 = vmatpush2.msra.mxu0 0.0
    %154 = vmatprep.subr.mxu0 0.0
    %155 = vmatpush2.msra.mxu0 0.0
    %156 = vmatprep.subr.mxu0 0.0
    %157 = vmatpush2.msra.mxu0 0.0
    %158 = vmatprep.subr.mxu0 0.0
    %159 = vmatpush2.msra.mxu0 0.0
    %160 = vmatprep.subr.mxu0 0.0
    %161 = vmatpush2.msra.mxu0 0.0
    %162 = vmatprep.subr.mxu0 0.0
    %163 = vmatpush2.msra.mxu0 0.0
    %164 = vmatprep.mubr.f32.mxu0 0.0
    %165 = vmatmul.mubr.f32.gmra.mxu0 %v98
    %v166 = vpop.f32.mrf.mxu0
    %v167 = vadd.f32 %v94, %v166
    %v168 = vpop.f32.mrf.mxu0
    %169 = vdwg.mxu0
    %v170 = vtanh.pop %v167
    %v171 = vld [vmem:[%s5] sm:$0xff]
    %v172 = vld [vmem:[%s5 + $0x8] sm:$0xff]
    %v173 = vld [vmem:[%s5 + $0x10] sm:$0xff]
    %v174 = vld [vmem:[%s5 + $0x18] sm:$0xff]
    %v175 = vld [vmem:[%s6] sm:$0x1]
    %v177 = vlaneseq
    %v178 = vshrl.u32 %v177, 7
    %v179 = vsub.s32 0, %v178
    %v180 = vrot.slane %v175, %v179
    %v183 = vsel %vm96, %v170, 0
    %185 = vmatprep.subr.mxu0 0.0
    %186 = vmatpush1.msra.mxu0 0.0
    %187 = vmatprep.subr.mxu0 0.0
    %188 = vmatpush1.msra.mxu0 0.0
    %189 = vmatprep.subr.mxu0 0.0
    %190 = vmatpush1.msra.mxu0 0.0
    %191 = vmatprep.subr.mxu0 0.0
    %192 = vmatpush1.msra.mxu0 0.0
    %193 = vmatprep.subr.mxu0 0.0
    %194 = vmatpush1.msra.mxu0 0.0
    %195 = vmatprep.subr.mxu0 0.0
    %196 = vmatpush1.msra.mxu0 0.0
    %197 = vmatprep.subr.mxu0 0.0
    %198 = vmatpush1.msra.mxu0 0.0
    %199 = vmatprep.subr.mxu0 0.0
    %200 = vmatpush1.msra.mxu0 0.0
    %201 = vmatprep.subr.mxu0 0.0
    %202 = vmatpush1.msra.mxu0 0.0
    %203 = vmatprep.subr.mxu0 0.0
    %204 = vmatpush1.msra.mxu0 0.0
    %205 = vmatprep.subr.mxu0 0.0
    %206 = vmatpush1.msra.mxu0 0.0
    %207 = vmatprep.subr.mxu0 0.0
    %208 = vmatpush1.msra.mxu0 0.0
    %209 = vmatprep.subr.mxu0 0.0
    %210 = vmatpush1.msra.mxu0 %v174
    %211 = vmatprep.subr.mxu0 0.0
    %212 = vmatpush1.msra.mxu0 %v173
    %213 = vmatprep.subr.mxu0 0.0
    %214 = vmatpush1.msra.mxu0 %v172
    %215 = vmatprep.subr.mxu0 0.0
    %216 = vmatpush1.msra.mxu0 %v171
    %217 = vmatprep.subr.mxu0 0.0
    %218 = vmatpush2.msra.mxu0 0.0
    %219 = vmatprep.subr.mxu0 0.0
    %220 = vmatpush2.msra.mxu0 0.0
    %221 = vmatprep.subr.mxu0 0.0
    %222 = vmatpush2.msra.mxu0 0.0
    %223 = vmatprep.subr.mxu0 0.0
    %224 = vmatpush2.msra.mxu0 0.0
    %225 = vmatprep.subr.mxu0 0.0
    %226 = vmatpush2.msra.mxu0 0.0
    %227 = vmatprep.subr.mxu0 0.0
    %228 = vmatpush2.msra.mxu0 0.0
    %229 = vmatprep.subr.mxu0 0.0
    %230 = vmatpush2.msra.mxu0 0.0
    %231 = vmatprep.subr.mxu0 0.0
    %232 = vmatpush2.msra.mxu0 0.0
    %233 = vmatprep.subr.mxu0 0.0
    %234 = vmatpush2.msra.mxu0 0.0
    %235 = vmatprep.subr.mxu0 0.0
    %236 = vmatpush2.msra.mxu0 0.0
    %237 = vmatprep.subr.mxu0 0.0
    %238 = vmatpush2.msra.mxu0 0.0
    %239 = vmatprep.subr.mxu0 0.0
    %240 = vmatpush2.msra.mxu0 0.0
    %241 = vmatprep.subr.mxu0 0.0
    %242 = vmatpush2.msra.mxu0 0.0
    %243 = vmatprep.subr.mxu0 0.0
    %244 = vmatpush2.msra.mxu0 0.0
    %245 = vmatprep.subr.mxu0 0.0
    %246 = vmatpush2.msra.mxu0 0.0
    %247 = vmatprep.subr.mxu0 0.0
    %248 = vmatpush2.msra.mxu0 0.0
    %249 = vmatprep.mubr.f32.mxu0 0.0
    %250 = vmatmul.mubr.f32.gmra.mxu0 %v183
    %v251 = vpop.f32.mrf.mxu0
    %v252 = vadd.f32 %v180, %v251
    %v253 = vpop.f32.mrf.mxu0
    %254 = vdwg.mxu0
    %v255 = vtanh.pop %v252
    %v256 = vld [vmem:[%s7] sm:$0xff]
    %v257 = vld [vmem:[%s7 + $0x8] sm:$0xff]
    %v258 = vld [vmem:[%s7 + $0x10] sm:$0xff]
    %v259 = vld [vmem:[%s7 + $0x18] sm:$0xff]
    %v260 = vld [vmem:[%s8] sm:$0x1]
    %v262 = vlaneseq
    %v263 = vshrl.u32 %v262, 7
    %v264 = vsub.s32 0, %v263
    %v265 = vrot.slane %v260, %v264
    %v268 = vsel %vm96, %v255, 0
    %270 = vmatprep.subr.mxu0 0.0
    %271 = vmatpush1.msra.mxu0 0.0
    %272 = vmatprep.subr.mxu0 0.0
    %273 = vmatpush1.msra.mxu0 0.0
    %274 = vmatprep.subr.mxu0 0.0
    %275 = vmatpush1.msra.mxu0 0.0
    %276 = vmatprep.subr.mxu0 0.0
    %277 = vmatpush1.msra.mxu0 0.0
    %278 = vmatprep.subr.mxu0 0.0
    %279 = vmatpush1.msra.mxu0 0.0
    %280 = vmatprep.subr.mxu0 0.0
    %281 = vmatpush1.msra.mxu0 0.0
    %282 = vmatprep.subr.mxu0 0.0
    %283 = vmatpush1.msra.mxu0 0.0
    %284 = vmatprep.subr.mxu0 0.0
    %285 = vmatpush1.msra.mxu0 0.0
    %286 = vmatprep.subr.mxu0 0.0
    %287 = vmatpush1.msra.mxu0 0.0
    %288 = vmatprep.subr.mxu0 0.0
    %289 = vmatpush1.msra.mxu0 0.0
    %290 = vmatprep.subr.mxu0 0.0
    %291 = vmatpush1.msra.mxu0 0.0
    %292 = vmatprep.subr.mxu0 0.0
    %293 = vmatpush1.msra.mxu0 0.0
    %294 = vmatprep.subr.mxu0 0.0
    %295 = vmatpush1.msra.mxu0 %v259
    %296 = vmatprep.subr.mxu0 0.0
    %297 = vmatpush1.msra.mxu0 %v258
    %298 = vmatprep.subr.mxu0 0.0
    %299 = vmatpush1.msra.mxu0 %v257
    %300 = vmatprep.subr.mxu0 0.0
    %301 = vmatpush1.msra.mxu0 %v256
    %302 = vmatprep.subr.mxu0 0.0
    %303 = vmatpush2.msra.mxu0 0.0
    %304 = vmatprep.subr.mxu0 0.0
    %305 = vmatpush2.msra.mxu0 0.0
    %306 = vmatprep.subr.mxu0 0.0
    %307 = vmatpush2.msra.mxu0 0.0
    %308 = vmatprep.subr.mxu0 0.0
    %309 = vmatpush2.msra.mxu0 0.0
    %310 = vmatprep.subr.mxu0 0.0
    %311 = vmatpush2.msra.mxu0 0.0
    %312 = vmatprep.subr.mxu0 0.0
    %313 = vmatpush2.msra.mxu0 0.0
    %314 = vmatprep.subr.mxu0 0.0
    %315 = vmatpush2.msra.mxu0 0.0
    %316 = vmatprep.subr.mxu0 0.0
    %317 = vmatpush2.msra.mxu0 0.0
    %318 = vmatprep.subr.mxu0 0.0
    %319 = vmatpush2.msra.mxu0 0.0
    %320 = vmatprep.subr.mxu0 0.0
    %321 = vmatpush2.msra.mxu0 0.0
    %322 = vmatprep.subr.mxu0 0.0
    %323 = vmatpush2.msra.mxu0 0.0
    %324 = vmatprep.subr.mxu0 0.0
    %325 = vmatpush2.msra.mxu0 0.0
    %326 = vmatprep.subr.mxu0 0.0
    %327 = vmatpush2.msra.mxu0 0.0
    %328 = vmatprep.subr.mxu0 0.0
    %329 = vmatpush2.msra.mxu0 0.0
    %330 = vmatprep.subr.mxu0 0.0
    %331 = vmatpush2.msra.mxu0 0.0
    %332 = vmatprep.subr.mxu0 0.0
    %333 = vmatpush2.msra.mxu0 0.0
    %334 = vmatprep.mubr.f32.mxu0 0.0
    %335 = vmatmul.mubr.f32.gmra.mxu0 %v268
    %v336 = vpop.f32.mrf.mxu0
    %v337 = vadd.f32 %v265, %v336
    %v338 = vpop.f32.mrf.mxu0
    %339 = vdwg.mxu0
    %vm340 = vcmask 64512
    %341 = vst.msk [vmem:[#allocation7] sm:$0xff] %vm340, %v337
    %v342 = vsel %vm340, %v337, -inf
    %343 = vmax.xlane.f32.xlu0 %v342
    %v344 = vpop.xlane.xlu0 %343
    %v345 = vsub.f32 %v337, %v344
    %v346 = vmul.f32 %v345, 1.442695
    %v347 = vpow.pop %v346
    %v348 = vsel %vm340, %v347, 0.0
    %349 = vadd.xlane.f32.xlu0 %v348
    %v350 = vpop.xlane.xlu0 %349
    %v351 = vrcp.pop %v350
    %v352 = vmul.f32 %v347, %v351
    %353 = vst.msk [vmem:[#allocation8] sm:$0xff] %vm340, %v352
    %v354 = vlaneseq
    %v355 = vand.u32 %v354, 127
    %vm356 = vcmp.eq.f32.partialorder %v337, %v344
    %v357 = vsel %vm356, %v355, 8
    %v358 = vsel %vm340, %v357, 2147483647
    %v359 = vand.u32 %v358, 65535
    %v360 = vshra.s32 %v358, 16
    %v361 = vcvt.s32.f32 %v359
    %v362 = vcvt.s32.f32 %v360
    %363 = vmin.xlane.f32.xlu0 %v362
    %v364 = vpop.xlane.xlu0 %363
    %vm365 = vcmp.eq.f32.partialorder %v362, %v364
    %v366 = vsel %vm365, %v361, inf
    %367 = vmin.xlane.f32.xlu0 %v366
    %v368 = vpop.xlane.xlu0 %367
    %v369 = vcvt.f32.s32 %v368
    %v370 = vcvt.f32.s32 %v364
    %v371 = vshll.u32 %v370, 16
    %v372 = vadd.s32 %v371, %v369
    %v373 = vlaneseq
    %v374 = vshrl.u32 %v373, 7
    %vm375 = vcmp.eq.s32.totalorder %v374, 0
    %s376 = sld [smem:[#allocation5]]
    %v377 = vstv %s376
    %v378 = vsel %vm375, %v377, 0
    %vm379 = vcmp.eq.s32.totalorder %v374, 1
    %s380 = sld [smem:[#allocation5 + $0x1]]
    %v381 = vstv %s380
    %v382 = vsel %vm379, %v381, %v378
    %vm383 = vcmp.eq.s32.totalorder %v374, 2
    %s384 = sld [smem:[#allocation5 + $0x2]]
    %v385 = vstv %s384
    %v386 = vsel %vm383, %v385, %v382
    %vm387 = vcmp.eq.s32.totalorder %v374, 3
    %s388 = sld [smem:[#allocation5 + $0x3]]
    %v389 = vstv %s388
    %v390 = vsel %vm387, %v389, %v386
    %vm391 = vcmp.eq.s32.totalorder %v374, 4
    %s392 = sld [smem:[#allocation5 + $0x4]]
    %v393 = vstv %s392
    %v394 = vsel %vm391, %v393, %v390
    %vm395 = vcmp.eq.s32.totalorder %v374, 5
    %s396 = sld [smem:[#allocation5 + $0x5]]
    %v397 = vstv %s396
    %v398 = vsel %vm395, %v397, %v394
    %vm399 = vcmp.eq.s32.totalorder %v374, 6
    %s400 = sld [smem:[#allocation5 + $0x6]]
    %v401 = vstv %s400
    %v402 = vsel %vm399, %v401, %v398
    %vm403 = vcmp.eq.s32.totalorder %v374, 7
    %s404 = sld [smem:[#allocation5 + $0x7]]
    %v405 = vstv %s404
    %v406 = vsel %vm403, %v405, %v402
    %vm407 = vcmp.eq.s32.totalorder %v355, %v406
    %v408 = vsel %vm407, %v337, 0.0
    %v409 = vsel %vm340, %v408, 0.0
    %410 = vadd.xlane.f32.xlu0 %v409
    %v411 = vpop.xlane.xlu0 %410
    %v412 = vlog2.pop %v350
    %v413 = vmul.f32 %v412, 0.6931472
    %v414 = vadd.f32 %v344, %v413
    %v415 = vsub.f32 %v414, %v411
    %vm416 = vcmask 7168
    %v417 = vsel %vm416, %v415, 0.0
    %418 = vadd.xlane.f32.xlu0 %v417
    %v419 = vpop.xlane.xlu0 %418
    %v420 = vrot.slane %v419, 4
    %v421 = vadd.f32 %v419, %v420
    %v422 = vrot.slane %v421, 2
    %v423 = vadd.f32 %v421, %v422
    %v424 = vrot.slane %v423, 1
    %v425 = vadd.f32 %v423, %v424
    %s426 = vtos %v425
    %v427 = vstv %s426
    %v428 = vmul.f32 %v427, 0.125
    %vm429 = vcmp.eq.s32.totalorder %v355, 0
    %v430 = vcvt.s32.f32 %v372
    %vm431 = vcmp.eq.s32.totalorder %v355, 1
    %v432 = vsel %vm431, %v428, 0.0
    %v433 = vsel %vm429, %v430, %v432
    %434 = vst [vmem:[%s17] sm:$0xff] %v433
    %v435 = vld [vmem:[%s9] sm:$0xff]
    %v436 = vld [vmem:[%s9 + $0x8] sm:$0xff]
    %v437 = vld [vmem:[%s9 + $0x10] sm:$0xff]
    %v438 = vld [vmem:[%s10] sm:$0xff]
    %v439 = vld [vmem:[%s10 + $0x8] sm:$0xff]
    %v440 = vld [vmem:[%s10 + $0x10] sm:$0xff]
    %v441 = vld [vmem:[%s11] sm:$0xff]
    %v442 = vld [vmem:[%s11 + $0x8] sm:$0xff]
    %v443 = vld [vmem:[%s11 + $0x10] sm:$0xff]
    %v444 = vsub.f32 %v438, %v441
    %v445 = vsub.f32 %v439, %v442
    %v446 = vsub.f32 %v440, %v443
    %v447 = vstv %s82
    %v448 = vmul.f32 %v447, %v444
    %v449 = vmul.f32 %v447, %v445
    %v450 = vmul.f32 %v447, %v446
    %v451 = vsub.f32 %v435, %v448
    %v452 = vsub.f32 %v436, %v449
    %v453 = vsub.f32 %v437, %v450
    %454 = vst [vmem:[%s18] sm:$0xff] %v451
    %455 = vst [vmem:[%s18 + $0x8] sm:$0xff] %v452
    %456 = vst [vmem:[%s18 + $0x10] sm:$0xff] %v453
    %v457 = vld [vmem:[%s12] sm:$0xff]
    %v458 = vld [vmem:[%s12 + $0x8] sm:$0xff]
    %v459 = vld [vmem:[%s12 + $0x10] sm:$0xff]
    %v460 = vld [vmem:[%s12 + $0x18] sm:$0xff]
    %v461 = vld [vmem:[%s12 + $0x20] sm:$0xff]
    %v462 = vld [vmem:[%s12 + $0x28] sm:$0xff]
    %v463 = vld [vmem:[%s12 + $0x30] sm:$0xff]
    %v464 = vld [vmem:[%s12 + $0x38] sm:$0xff]
    %v465 = vld [vmem:[%s12 + $0x40] sm:$0xff]
    %v466 = vld [vmem:[%s12 + $0x48] sm:$0xff]
    %v467 = vstv %s83
    %v468 = vmul.f32 %v467, %v457
    %v469 = vmul.f32 %v467, %v458
    %v470 = vmul.f32 %v467, %v459
    %v471 = vmul.f32 %v467, %v460
    %v472 = vmul.f32 %v467, %v461
    %v473 = vmul.f32 %v467, %v462
    %v474 = vmul.f32 %v467, %v463
    %v475 = vmul.f32 %v467, %v464
    %v476 = vmul.f32 %v467, %v465
    %v477 = vmul.f32 %v467, %v466
    %s478 = ssub.f32 1.0, %s83
    %v479 = vld [vmem:[%s13] sm:$0xff]
    %v480 = vld [vmem:[%s13 + $0x8] sm:$0xff]
    %v481 = vld [vmem:[%s13 + $0x10] sm:$0xff]
    %v482 = vld [vmem:[%s13 + $0x18] sm:$0xff]
    %v483 = vld [vmem:[%s13 + $0x20] sm:$0xff]
    %v484 = vld [vmem:[%s13 + $0x28] sm:$0xff]
    %v485 = vld [vmem:[%s13 + $0x30] sm:$0xff]
    %v486 = vld [vmem:[%s13 + $0x38] sm:$0xff]
    %v487 = vld [vmem:[%s13 + $0x40] sm:$0xff]
    %v488 = vld [vmem:[%s13 + $0x48] sm:$0xff]
    %v489 = vld [vmem:[%s14] sm:$0xff]
    %v490 = vld [vmem:[%s14 + $0x8] sm:$0xff]
    %v491 = vld [vmem:[%s14 + $0x10] sm:$0xff]
    %v492 = vld [vmem:[%s14 + $0x18] sm:$0xff]
    %v493 = vld [vmem:[%s14 + $0x20] sm:$0xff]
    %v494 = vld [vmem:[%s14 + $0x28] sm:$0xff]
    %v495 = vld [vmem:[%s14 + $0x30] sm:$0xff]
    %v496 = vld [vmem:[%s14 + $0x38] sm:$0xff]
    %v497 = vld [vmem:[%s14 + $0x40] sm:$0xff]
    %v498 = vld [vmem:[%s14 + $0x48] sm:$0xff]
    %v499 = vsub.f32 %v479, %v489
    %v500 = vsub.f32 %v480, %v490
    %v501 = vsub.f32 %v481, %v491
    %v502 = vsub.f32 %v482, %v492
    %v503 = vsub.f32 %v483, %v493
    %v504 = vsub.f32 %v484, %v494
    %v505 = vsub.f32 %v485, %v495
    %v506 = vsub.f32 %v486, %v496
    %v507 = vsub.f32 %v487, %v497
    %v508 = vsub.f32 %v488, %v498
    %v509 = vstv %s478
    %v510 = vmul.f32 %v509, %v499
    %v511 = vmul.f32 %v509, %v500
    %v512 = vmul.f32 %v509, %v501
    %v513 = vmul.f32 %v509, %v502
    %v514 = vmul.f32 %v509, %v503
    %v515 = vmul.f32 %v509, %v504
    %v516 = vmul.f32 %v509, %v505
    %v517 = vmul.f32 %v509, %v506
    %v518 = vmul.f32 %v509, %v507
    %v519 = vmul.f32 %v509, %v508
    %v520 = vadd.f32 %v468, %v510
    %v521 = vadd.f32 %v469, %v511
    %v522 = vadd.f32 %v470, %v512
    %v523 = vadd.f32 %v471, %v513
    %v524 = vadd.f32 %v472, %v514
    %v525 = vadd.f32 %v473, %v515
    %v526 = vadd.f32 %v474, %v516
    %v527 = vadd.f32 %v475, %v517
    %v528 = vadd.f32 %v476, %v518
    %v529 = vadd.f32 %v477, %v519
    %530 = vst [vmem:[%s19] sm:$0xff] %v520
    %531 = vst [vmem:[%s19 + $0x8] sm:$0xff] %v521
    %532 = vst [vmem:[%s19 + $0x10] sm:$0xff] %v522
    %533 = vst [vmem:[%s19 + $0x18] sm:$0xff] %v523
    %534 = vst [vmem:[%s19 + $0x20] sm:$0xff] %v524
    %535 = vst [vmem:[%s19 + $0x28] sm:$0xff] %v525
    %536 = vst [vmem:[%s19 + $0x30] sm:$0xff] %v526
    %537 = vst [vmem:[%s19 + $0x38] sm:$0xff] %v527
    %538 = vst [vmem:[%s19 + $0x40] sm:$0xff] %v528
    %539 = vst [vmem:[%s19 + $0x48] sm:$0xff] %v529
    // Predicated region
    $region70: #{learner_step.1} parent=1 // pred_check
      _
    $region71: #{learner_step.1} parent=1 // pred_check_branch
      %541 = sbr.rel (0) target = $region73
    $region72: #{learner_step.1} parent=1 // pred_region
      %s543 = ssub.s32 128, 128
      %544 = vsyncadd [#allocation3], %s543
      %s546 = sshll.u32 [#allocation7], 4
      %s547 = int_to_ptr.vmem [resolvable:$true] %s546
      %549 = dma.vmem_to_hbm [thread:$0]  %s547, 128, %s15, [#allocation3]
    $region73: #{learner_step.1} parent=1 // pred_fallthru
      _
    // Predicated region
    $region74: #{learner_step.1} parent=1 // pred_check
      _
    $region75: #{learner_step.1} parent=1 // pred_check_branch
      %551 = sbr.rel (0) target = $region77
    $region76: #{learner_step.1} parent=1 // pred_region
      %s553 = ssub.s32 128, 128
      %554 = vsyncadd [#allocation9], %s553
      %s556 = sshll.u32 [#allocation8], 4
      %s557 = int_to_ptr.vmem [resolvable:$true] %s556
      %559 = dma.vmem_to_hbm [thread:$0]  %s557, 128, %s16, [#allocation9]
    $region77: #{learner_step.1} parent=1 // pred_fallthru
      _
    // Predicated region
    $region78: #{learner_step.1} parent=1 // pred_check
      _
    $region79: #{learner_step.1} parent=1 // pred_check_branch
      %561 = sbr.rel (0) target = $region81
    $region80: #{learner_step.1} parent=1 // pred_region
      _
    $region81: #{learner_step.1} parent=1 // pred_fallthru
      _
    // Predicated region
    $region82: #{learner_step.1} parent=1 // pred_check
      _
    $region83: #{learner_step.1} parent=1 // pred_check_branch
      %563 = sbr.rel (0) target = $region85
    $region84: #{learner_step.1} parent=1 // pred_region
      _
    $region85: #{learner_step.1} parent=1 // pred_fallthru
      _
    // Predicated region
    $region86: #{learner_step.1} parent=1 // pred_check
      _
    $region87: #{learner_step.1} parent=1 // pred_check_branch
      %565 = sbr.rel (0) target = $region89
    $region88: #{learner_step.1} parent=1 // pred_region
      _
    $region89: #{learner_step.1} parent=1 // pred_fallthru
      _
    // Predicated region
    $region90: #{learner_step.1} parent=1 // pred_check
      _
    $region91: #{learner_step.1} parent=1 // pred_check_branch
      %567 = sbr.rel (0) target = $region93
    $region92: #{learner_step.1} parent=1 // pred_region
      %568 = dma.done [#allocation3], 128
    $region93: #{learner_step.1} parent=1 // pred_fallthru
      _
    // Predicated region
    $region94: #{learner_step.1} parent=1 // pred_check
      _
    $region95: #{learner_step.1} parent=1 // pred_check_branch
      %570 = sbr.rel (0) target = $region97
    $region96: #{learner_step.1} parent=1 // pred_region
      %571 = dma.done [#allocation9], 128
    $region97: #{learner_step.1} parent=1 // pred_fallthru
      _
    // Predicated region
    $region98: #{learner_step.1} parent=1 // pred_check
      _
    $region99: #{learner_step.1} parent=1 // pred_check_branch
      %573 = sbr.rel (0) target = $region101
    $region100: #{learner_step.1} parent=1 // pred_region
      _
    $region101: #{learner_step.1} parent=1 // pred_fallthru
      _
    // Predicated region
    $region102: #{learner_step.1} parent=1 // pred_check
      _
    $region103: #{learner_step.1} parent=1 // pred_check_branch
      %575 = sbr.rel (0) target = $region105
    $region104: #{learner_step.1} parent=1 // pred_region
      _
    $region105: #{learner_step.1} parent=1 // pred_fallthru
      _
    // Predicated region
    $region106: #{learner_step.1} parent=1 // pred_check
      _
    $region107: #{learner_step.1} parent=1 // pred_check_branch
      %577 = sbr.rel (0) target = $region109
    $region108: #{learner_step.1} parent=1 // pred_region
      _
    $region109: #{learner_step.1} parent=1 // pred_fallthru
      _
    %578 = vsyncpa [#allocation3], 1
    %579 = vsyncpa [#allocation9], 1
    %580 = vsyncpa [#allocation4], 1
    %581 = vsyncpa [#allocation6], 1

</llo_original>
